<compile_context>
chip_gen: v7x
topology: tpu7x:2x2x1
jax: 0.10.0
libtpu: 0.0.40
codegen_flags: <defaults>
</compile_context>

<pallas_src>
import math

import jax
import jax.numpy as jnp
from jax.experimental import pallas as pl
from jax.experimental.pallas import tpu as pltpu

_LANE = 128
_SUBLANE = 8


def _round_up(x: int, m: int) -> int:
    return ((x + m - 1) // m) * m


def _cdiv(a: int, b: int) -> int:
    return (a + b - 1) // b


def _fullk_kernel(x_ref, wt_ref, o_ref):
    # x_ref : (TM, K_kept)   gathered activations (input dtype)
    # wt_ref: (K_kept, TN)   compressed, pre-transposed weight (compute dtype)
    # o_ref : (TM, TN)       output tile (input dtype)
    a = x_ref[...].astype(wt_ref.dtype)
    o_ref[...] = jnp.dot(
        a, wt_ref[...], preferred_element_type=jnp.float32).astype(o_ref.dtype)


def _ksplit_kernel(x_ref, wt_ref, o_ref, acc_ref):
    # 3-D (M, N, K) fallback for very large K_kept: f32 accumulator resident
    # across the innermost ("arbitrary") K axis.
    @pl.when(pl.program_id(2) == 0)
    def _():
        acc_ref[...] = jnp.zeros_like(acc_ref)

    a = x_ref[...].astype(wt_ref.dtype)
    acc_ref[...] += jnp.dot(a, wt_ref[...], preferred_element_type=jnp.float32)

    @pl.when(pl.program_id(2) == pl.num_programs(2) - 1)
    def _():
        o_ref[...] = acc_ref[...].astype(o_ref.dtype)


class L1PrunedInputLinear:
    """JAX/Pallas port of the PyTorch L1PrunedInputLinear module."""

    def __init__(self, W, compression_ratio: float, compute_dtype=jnp.bfloat16):
        W = jnp.asarray(W)
        out_features, in_features = W.shape
        kept_features = max(in_features - int(in_features * compression_ratio), 1)

        # Column importance = L1 norm over the output dim; keep top-k, sorted.
        col_scores = jnp.abs(W).sum(axis=0)
        _, top_idx = jax.lax.top_k(col_scores, kept_features)
        self.kept_idx = jnp.sort(top_idx)                      # (K_kept,)
        self.W_pruned = jnp.take(W, self.kept_idx, axis=1)     # (N_out, K_kept)

        self.in_features = int(in_features)
        self.out_features = int(out_features)
        self.k_kept = int(kept_features)
        self.n_pad = _round_up(self.out_features, _LANE)
        self.compute_dtype = compute_dtype

        # Generation-aware VMEM budget (v7x: 64 MiB/TC, v5e/v6e: 128 MiB).
        try:
            vmem_cap = int(pltpu.get_tpu_info().vmem_capacity_bytes)
        except Exception:
            vmem_cap = 64 * 1024 * 1024          # conservative: fits every chip
        self.vmem_limit = min(int(vmem_cap * 0.85), 100 * 1024 * 1024)
        self._tile_budget = int(self.vmem_limit * 0.7)

        # Decide once whether a full-K block fits VMEM even at the smallest
        # (128, 128) output tile with double buffering; if so, no K grid axis.
        w_bytes = jnp.dtype(compute_dtype).itemsize
        min_fullk_bytes = 2 * (128 * self.k_kept * 4
                               + self.k_kept * _LANE * w_bytes
                               + 128 * _LANE * 4)
        self.use_fullk = min_fullk_bytes <= self._tile_budget

        # One-time weight prep: prune, transpose, cast, pad to lane-dense N
        # (and to a 128-multiple K only for the K-split fallback).
        wt = self.W_pruned.T.astype(compute_dtype)             # (K_kept, N_out)
        if self.use_fullk:
            self.k_pad = self.k_kept
            self.Wt = jnp.pad(wt, ((0, 0), (0, self.n_pad - self.out_features)))
        else:
            self.k_pad = _round_up(self.k_kept, _LANE)
            self.Wt = jnp.pad(
                wt, ((0, self.k_pad - self.k_kept),
                     (0, self.n_pad - self.out_features)))

    # ---- tile planning -----------------------------------------------------

    def _plan_fullk(self, m, x_bytes, o_bytes):
        k = self.k_kept
        w_bytes = self.Wt.dtype.itemsize
        tm = min(512, _round_up(m, _SUBLANE))
        tn = min(1024, self.n_pad)

        # v7x megacore: make sure the "parallel" (M, N) grid has >= 2 tiles.
        if (_cdiv(m, tm) == 1 and _cdiv(self.out_features, tn) < 2
                and self.n_pad >= 2 * _LANE):
            tn = max(_LANE, (self.n_pad // 2) // _LANE * _LANE)

        def tile_bytes(tm_, tn_):
            # inputs + output, each double-buffered by the BlockSpec pipeline.
            return 2 * (tm_ * k * x_bytes + k * tn_ * w_bytes + tm_ * tn_ * o_bytes)

        while tile_bytes(tm, tn) > self._tile_budget and tm > 128:
            tm = max(128, _round_up(tm // 2, _SUBLANE))
        while tile_bytes(tm, tn) > self._tile_budget and tn > _LANE:
            tn = max(_LANE, (tn // 2) // _LANE * _LANE)
        return tm, tn

    def _plan_ksplit(self, m, x_bytes, o_bytes):
        w_bytes = self.Wt.dtype.itemsize
        tm = min(512, _round_up(m, _SUBLANE))
        tn = min(512, self.n_pad)
        tk = _LANE
        for c in (2048, 1024, 512, 256, 128):
            if self.k_pad % c == 0:
                tk = c
                break

        def tile_bytes(tm_, tn_, tk_):
            return (2 * (tm_ * tk_ * x_bytes + tk_ * tn_ * w_bytes
                         + tm_ * tn_ * o_bytes)
                    + tm_ * tn_ * 4)            # resident f32 accumulator

        while tile_bytes(tm, tn, tk) > self._tile_budget and tk > _LANE:
            tk = max(_LANE, tk // 2)
        while tile_bytes(tm, tn, tk) > self._tile_budget and tm > 128:
            tm = max(128, _round_up(tm // 2, _SUBLANE))
        while tile_bytes(tm, tn, tk) > self._tile_budget and tn > _LANE:
            tn = max(_LANE, (tn // 2) // _LANE * _LANE)
        return tm, tn, tk

    # ---- forward -----------------------------------------------------------

    def __call__(self, x: jnp.ndarray) -> jnp.ndarray:
        lead_shape = x.shape[:-1]
        m = int(math.prod(lead_shape)) if lead_shape else 1
        out_dtype = x.dtype
        x_bytes = x.dtype.itemsize
        o_bytes = jnp.dtype(out_dtype).itemsize

        x2d = x.reshape(m, self.in_features)
        # Gather the kept input columns once (mem-bound, M*K_kept elements);
        # the kernel then does only useful MXU work over the compressed K.
        xg = jnp.take(x2d, self.kept_idx, axis=1)              # (M, K_kept)

        if self.use_fullk:
            tm, tn = self._plan_fullk(m, x_bytes, o_bytes)
            grid_m = _cdiv(m, tm)
            grid_n = _cdiv(self.out_features, tn)
            grid = (grid_m, grid_n)

            flops = 2 * m * (grid_n * tn) * self.k_kept
            bytes_accessed = (grid_n * m * self.k_kept * x_bytes
                              + grid_m * self.Wt.size * self.Wt.dtype.itemsize
                              + m * self.out_features * o_bytes)

            out2d = pl.pallas_call(
                _fullk_kernel,
                out_shape=jax.ShapeDtypeStruct((m, self.out_features), out_dtype),
                grid_spec=pltpu.PrefetchScalarGridSpec(
                    num_scalar_prefetch=0,
                    grid=grid,
                    in_specs=[
                        pl.BlockSpec((tm, self.k_kept), lambda i, j: (i, 0)),
                        pl.BlockSpec((self.k_kept, tn), lambda i, j: (0, j)),
                    ],
                    out_specs=pl.BlockSpec((tm, tn), lambda i, j: (i, j)),
                ),
                compiler_params=pltpu.CompilerParams(
                    dimension_semantics=("parallel", "parallel"),
                    vmem_limit_bytes=self.vmem_limit,
                ),
                cost_estimate=pl.CostEstimate(
                    flops=flops, transcendentals=0,
                    bytes_accessed=bytes_accessed),
            )(xg, self.Wt)
        else:
            tm, tn, tk = self._plan_ksplit(m, x_bytes, o_bytes)
            # Pad K once so every K block is exact (partial K blocks would let
            # stale VMEM contaminate the resident accumulator).
            xg = jnp.pad(xg, ((0, 0), (0, self.k_pad - self.k_kept)))
            grid_m = _cdiv(m, tm)
            grid_n = _cdiv(self.out_features, tn)
            grid = (grid_m, grid_n, self.k_pad // tk)

            flops = 2 * m * (grid_n * tn) * self.k_pad
            bytes_accessed = (grid_n * m * self.k_pad * x_bytes
                              + grid_m * self.Wt.size * self.Wt.dtype.itemsize
                              + m * self.out_features * o_bytes)

            out2d = pl.pallas_call(
                _ksplit_kernel,
                out_shape=jax.ShapeDtypeStruct((m, self.out_features), out_dtype),
                grid_spec=pltpu.PrefetchScalarGridSpec(
                    num_scalar_prefetch=0,
                    grid=grid,
                    in_specs=[
                        pl.BlockSpec((tm, tk), lambda i, j, k: (i, k)),
                        pl.BlockSpec((tk, tn), lambda i, j, k: (k, j)),
                    ],
                    out_specs=pl.BlockSpec((tm, tn), lambda i, j, k: (i, j)),
                    scratch_shapes=[pltpu.VMEM((tm, tn), jnp.float32)],
                ),
                compiler_params=pltpu.CompilerParams(
                    dimension_semantics=("parallel", "parallel", "arbitrary"),
                    vmem_limit_bytes=self.vmem_limit,
                ),
                cost_estimate=pl.CostEstimate(
                    flops=flops, transcendentals=0,
                    bytes_accessed=bytes_accessed),
            )(xg, self.Wt)

        return out2d.reshape(*lead_shape, self.out_features)


if __name__ == "__main__":
    key = jax.random.PRNGKey(0)
    k_w, k_x = jax.random.split(key)

    # Small shapes that still exercise K compression (320 -> 160 kept columns),
    # a non-128-multiple output dim (200) and a 2-tile N grid.
    in_features = 320
    out_features = 200
    compression_ratio = 0.5    # keep 160 of 320 input features
    batch, seq = 2, 8          # M = 16

    W = jax.random.normal(k_w, (out_features, in_features), dtype=jnp.float32)
    x = jax.random.normal(k_x, (batch, seq, in_features), dtype=jnp.float32)

    module = L1PrunedInputLinear(W, compression_ratio)
    y = jax.block_until_ready(module(x))
    assert y.shape == (batch, seq, out_features)

    # Pure-JAX reference with identical semantics and identical bf16 operand
    # rounding (f32 accumulation), so only summation-order noise remains.
    pruned = jnp.take(x, module.kept_idx, axis=-1)
    ref = jnp.dot(
        pruned.astype(jnp.bfloat16),
        module.W_pruned.T.astype(jnp.bfloat16),
        preferred_element_type=jnp.float32,
    ).astype(x.dtype)
    assert jnp.allclose(y, ref, atol=1e-2, rtol=1e-2), float(jnp.max(jnp.abs(y - ref)))

    print("KERNEL_OK")
</pallas_src>

<mosaic_0001>
module attributes {stable_mosaic.version = 11 : i64} {
  func.func @_fullk_kernel(%arg0: i32, %arg1: i32, %arg2: memref<16x160xf32, #tpu.memory_space<vmem>>, %arg3: memref<160x128xbf16, #tpu.memory_space<vmem>>, %arg4: memref<16x128xf32, #tpu.memory_space<vmem>>) attributes {dimension_semantics = [#tpu.dimension_semantics<parallel>, #tpu.dimension_semantics<parallel>], iteration_bounds = array<i64: 1, 2>, scalar_prefetch = 0 : i64, scratch_operands = 0 : i64, tpu.core_type = #tpu.core_type<tc>, window_params = [{transform_indices = @transform_0, window_bounds = array<i64: 16, 160>}, {transform_indices = @transform_1, window_bounds = array<i64: 160, 128>}, {transform_indices = @transform_2, window_bounds = array<i64: 16, 128>}]} {
    %c0 = arith.constant 0 : index
    %c0_0 = arith.constant 0 : index
    %0 = vector.load %arg2[%c0, %c0_0] : memref<16x160xf32, #tpu.memory_space<vmem>>, vector<16x160xf32>
    %1 = arith.truncf %0 : vector<16x160xf32> to vector<16x160xbf16>
    %c0_1 = arith.constant 0 : index
    %c0_2 = arith.constant 0 : index
    %2 = vector.load %arg3[%c0_1, %c0_2] : memref<160x128xbf16, #tpu.memory_space<vmem>>, vector<160x128xbf16>
    %cst = arith.constant dense<0.000000e+00> : vector<16x128xf32>
    %3 = tpu.matmul %1, %2, %cst {dimension_numbers = #tpu.dot_dimension_numbers<[1], [0], [0], [1], [0, 0, 1, 1], [], []>} : vector<16x160xbf16>, vector<160x128xbf16>, vector<16x128xf32> -> vector<16x128xf32>
    %c0_3 = arith.constant 0 : index
    %c0_4 = arith.constant 0 : index
    %4 = vector.load %arg4[%c0_3, %c0_4] : memref<16x128xf32, #tpu.memory_space<vmem>>, vector<16x128xf32>
    tpu.vector_store %arg4[%c0_3, %c0_4], %3 {strides = array<i32>} : memref<16x128xf32, #tpu.memory_space<vmem>>, vector<16x128xf32>,
    return
  }
  func.func @transform_0(%arg0: i32, %arg1: i32) -> (i32, i32) {
    %c0_i32 = arith.constant 0 : i32
    %c0_i32_0 = arith.constant 0 : i32
    return %arg0, %c0_i32 : i32, i32
  }
  func.func @transform_1(%arg0: i32, %arg1: i32) -> (i32, i32) {
    %c0_i32 = arith.constant 0 : i32
    %c0_i32_0 = arith.constant 0 : i32
    return %c0_i32, %arg1 : i32, i32
  }
  func.func @transform_2(%arg0: i32, %arg1: i32) -> (i32, i32) {
    %c0_i32 = arith.constant 0 : i32
    return %arg0, %arg1 : i32, i32
  }
}

</mosaic_0001>

<llo_original>
// kernel: tpu_custom_call.1
$region0: #{tpu_custom_call.1}
  #allocation0 [shape = 'u32[]', space=smem, size = 0x4, offset = 0x4, fixed_abs, tag = 'smem constant byte address 0x4 - core index']
  #allocation1 [shape = 'u32[144,128]{1,0:T(1,128)}', space=vmem, size = 0x12000, scoped, tag = 'internal scratch']
  %s0 = inlined_call_operand.hbm [shape: f32[16,160], index: 0, kind: input, shape index: {}]
  %s1 = inlined_call_operand.hbm [shape: bf16[160,256], index: 1, kind: input, shape index: {}]
  %s2 = inlined_call_operand.hbm [shape: f32[16,200], index: 2, kind: output, shape index: {}]
  %s3 = sld [smem:[#allocation0]]
  $region49: #{tpu_custom_call.1} parent=0
    _
  %s5 = ssub.s32 1, %s3
  %s6 = scalar_select 0, %s5, %s3
  $region1: #{tpu_custom_call.1} parent=0
    #allocation2 [shape = 'u8[16384]{0}', space=vmem, size = 0x4000, scoped, tag = 'input window, operand 0, single buffered']
    #allocation3 [shape = 's32[2]{0}', space=sflag, size = 0x8, scoped, tag = 'scoped memory for tpu_custom_call.1']
    #allocation4 [shape = 's32[2]{0}', space=sflag, size = 0x8, scoped, tag = 'scoped memory for tpu_custom_call.1']
    #allocation5 [shape = 'u8[81920]{0}', space=vmem, size = 0x14000, scoped, tag = 'input window, operand 1']
    #allocation6 [shape = 's32[2]{0}', space=sflag, size = 0x8, scoped, tag = 'scoped memory for tpu_custom_call.1']
    #allocation7 [shape = 'u8[16384]{0}', space=vmem, size = 0x4000, scoped, tag = 'output window, operand 0']
    %7 = vsyncpa [#allocation3], 0
    %8 = vsyncpa [#allocation6], 0
    %s9 = scalar_lea.sflag [#allocation6], 1
    %10 = vsyncpa %s9, 0
    %11 = vsyncpa [#allocation4], 0
    %s12 = scalar_lea.sflag [#allocation4], 1
    %13 = vsyncpa %s12, 0
    loop: start=0, step=1, limit=4
    $region2: #{tpu_custom_call.1} parent=1 // loop_pre_header
      _
    $region3: #{tpu_custom_call.1} parent=1 // loop_header
      %s15 = sphi 0, %s19
      %p16 = scmp.ge.s32.totalorder %s15, 4
      %s22 = sphi 0, %s34
      %s23 = sphi 0, %s30
      %s24 = sphi 0, %s22
      %s25 = sphi 0, %s23
      %s26 = sphi 0, %s24
      %s27 = sphi 0, %s25
      %s37 = sphi 0, %s39
      %s40 = sphi 0, %s37
      %s41 = sphi 0, %s40
      %s57 = sphi 0, %s41
      %s63 = sphi 0, %s65
      %s66 = sphi 0, %s63
      %s67 = sphi 0, %s66
      %s83 = sphi 0, %s67
      %s91 = sphi 0, %s93
      %s94 = sphi 0, %s91
      %s95 = sphi 0, %s94
      %s111 = sphi 0, %s95
    $region4: #{tpu_custom_call.1} parent=1 // loop_header_branch
      %18 = sbr.rel (%p16) target = $region8
    $region5: #{tpu_custom_call.1} parent=1 // loop_body
      %s20 = ssub.s32 %s15, 1
      %s21 = ssub.s32 %s15, 2
      %s28 = sadd.s32 1, %s23
      %p29 = scmp.ge.s32.totalorder %s28, 2
      %s30 = scalar_select %p29, 0, %s28
      %s31 = sadd.s32 1, %s22
      %s32 = scalar_select %p29, %s31, %s22
      %p33 = scmp.ge.s32.totalorder %s32, 1
      %s34 = scalar_select %p33, 0, %s32
      %s35 = ssub.s32 %s22, %s34
      %p36 = scmp.eq.s32.totalorder %s35, 0
      %s38 = sadd.s32 %s37, 1
      %s39 = scalar_select %p36, %s37, %s38
      %p42 = pneg %p36
      %p43 = scmp.eq.s32.totalorder %s15, 1
      %p44 = por %p42, %p43
      %p45 = scmp.ne.s32.totalorder %s37, %s40
      %p46 = scmp.eq.s32.totalorder %s15, 0
      %p47 = por %p45, %p46
      %p48 = scmp.ne.s32.totalorder %s37, %s40
      %p49 = scmp.eq.s32.totalorder %s20, 1
      %p50 = por %p48, %p49
      %p51 = scmp.ne.s32.totalorder %s40, %s41
      %p52 = scmp.eq.s32.totalorder %s20, 0
      %p53 = por %p51, %p52
      %p54 = scmp.ne.s32.totalorder %s40, %s41
      %p55 = scmp.eq.s32.totalorder %s21, 1
      %p56 = por %p54, %p55
      %p58 = scmp.ne.s32.totalorder %s41, %s57
      %p59 = scmp.eq.s32.totalorder %s21, 0
      %p60 = por %p58, %p59
      %s61 = ssub.s32 %s23, %s30
      %p62 = scmp.eq.s32.totalorder %s61, 0
      %s64 = sadd.s32 %s63, 1
      %s65 = scalar_select %p62, %s63, %s64
      %p68 = pneg %p62
      %p69 = scmp.eq.s32.totalorder %s15, 1
      %p70 = por %p68, %p69
      %p71 = scmp.ne.s32.totalorder %s63, %s66
      %p72 = scmp.eq.s32.totalorder %s15, 0
      %p73 = por %p71, %p72
      %p74 = scmp.ne.s32.totalorder %s63, %s66
      %p75 = scmp.eq.s32.totalorder %s20, 1
      %p76 = por %p74, %p75
      %p77 = scmp.ne.s32.totalorder %s66, %s67
      %p78 = scmp.eq.s32.totalorder %s20, 0
      %p79 = por %p77, %p78
      %p80 = scmp.ne.s32.totalorder %s66, %s67
      %p81 = scmp.eq.s32.totalorder %s21, 1
      %p82 = por %p80, %p81
      %p84 = scmp.ne.s32.totalorder %s67, %s83
      %p85 = scmp.eq.s32.totalorder %s21, 0
      %p86 = por %p84, %p85
      %s87 = ssub.s32 %s22, %s34
      %s88 = ssub.s32 %s23, %s30
      %s89 = sor.u32 %s87, %s88
      %p90 = scmp.eq.s32.totalorder %s89, 0
      %s92 = sadd.s32 %s91, 1
      %s93 = scalar_select %p90, %s91, %s92
      %p96 = pneg %p90
      %p97 = scmp.eq.s32.totalorder %s15, 1
      %p98 = por %p96, %p97
      %p99 = scmp.ne.s32.totalorder %s91, %s94
      %p100 = scmp.eq.s32.totalorder %s15, 0
      %p101 = por %p99, %p100
      %p102 = scmp.ne.s32.totalorder %s91, %s94
      %p103 = scmp.eq.s32.totalorder %s20, 1
      %p104 = por %p102, %p103
      %p105 = scmp.ne.s32.totalorder %s94, %s95
      %p106 = scmp.eq.s32.totalorder %s20, 0
      %p107 = por %p105, %p106
      %p108 = scmp.ne.s32.totalorder %s94, %s95
      %p109 = scmp.eq.s32.totalorder %s21, 1
      %p110 = por %p108, %p109
      %p112 = scmp.ne.s32.totalorder %s95, %s111
      %p113 = scmp.eq.s32.totalorder %s21, 0
      %p114 = por %p112, %p113
      %p115 = scmp.le.s32.totalorder 1, %s15
      %p116 = scmp.lt.s32.totalorder %s15, 3
      %p117 = pnand %p115, %p116
      %p118 = pneg %p117
      // Predicated region
      $region9: #{tpu_custom_call.1} parent=5 // pred_check
        _
      $region10: #{tpu_custom_call.1} parent=5 // pred_check_branch
        %120 = sbr.rel (%p117) target = $region12
      $region11: #{tpu_custom_call.1} parent=5 // pred_region
        %s121 = ssub.s32 %s15, 1
        // Predicated region
        $region13: #{tpu_custom_call.1} parent=11 // pred_check
          %p122 = pneg %p53
        $region14: #{tpu_custom_call.1} parent=11 // pred_check_branch
          %124 = sbr.rel (%p122) target = $region16
        $region15: #{tpu_custom_call.1} parent=11 // pred_region
          %s125 = smul.u32 2, %s24
          %s127 = ssub.s32 512, 512
          %128 = vsyncadd [#allocation3], %s127
          %s129 = smul.addr %s125, 2
          %s130 = smul.addr %s129, 128
          %s131 = scalar_lea.hbm %s0, %s130
          %s132 = sshll.u32 [#allocation2], 4
          %s133 = int_to_ptr.vmem [resolvable:$true] %s132
          %138 = dma.hbm_to_vmem [thread:$0]  %s131, 512, %s133, [#allocation3], 256, 256, 16
        $region16: #{tpu_custom_call.1} parent=11 // pred_fallthru
          _
      $region12: #{tpu_custom_call.1} parent=5 // pred_fallthru
        _
      %p139 = scmp.lt.s32.totalorder %s15, 2
      // Predicated region
      $region17: #{tpu_custom_call.1} parent=5 // pred_check
        %p140 = pneg %p139
      $region18: #{tpu_custom_call.1} parent=5 // pred_check_branch
        %142 = sbr.rel (%p140) target = $region20
      $region19: #{tpu_custom_call.1} parent=5 // pred_region
        // Predicated region
        $region21: #{tpu_custom_call.1} parent=19 // pred_check
          %p143 = pneg %p73
        $region22: #{tpu_custom_call.1} parent=19 // pred_check_branch
          %145 = sbr.rel (%p143) target = $region24
        $region23: #{tpu_custom_call.1} parent=19 // pred_region
          %s146 = sand.u32 %s63, 1
          %s147 = scalar_lea.sflag [#allocation6], %s146
          %s148 = sand.u32 %s63, 1
          %s149 = smul.addr %s148, 80
          %s150 = scalar_lea.vmem [#allocation5], %s149
          %s152 = ssub.s32 1280, 1280
          %153 = vsyncadd %s147, %s152
          %s154 = smul.addr %s23, 64
          %s155 = scalar_lea.hbm %s1, %s154
          %s156 = sshll.u32 %s150, 4
          %s157 = int_to_ptr.vmem [resolvable:$true] %s156
          %162 = dma.hbm_to_vmem [thread:$0]  %s155, 1280, %s157, %s147, 128, 64, 4
        $region24: #{tpu_custom_call.1} parent=19 // pred_fallthru
          _
      $region20: #{tpu_custom_call.1} parent=5 // pred_fallthru
        _
      %p163 = scmp.le.s32.totalorder 1, %s15
      %p164 = scmp.lt.s32.totalorder %s15, 3
      %p165 = pnand %p163, %p164
      %p166 = pneg %p165
      // Predicated region
      $region25: #{tpu_custom_call.1} parent=5 // pred_check
        _
      $region26: #{tpu_custom_call.1} parent=5 // pred_check_branch
        %168 = sbr.rel (%p165) target = $region28
      $region27: #{tpu_custom_call.1} parent=5 // pred_region
        %s169 = ssub.s32 %s15, 1
        // Predicated region
        $region29: #{tpu_custom_call.1} parent=27 // pred_check
          %p170 = pneg %p53
        $region30: #{tpu_custom_call.1} parent=27 // pred_check_branch
          %172 = sbr.rel (%p170) target = $region32
        $region31: #{tpu_custom_call.1} parent=27 // pred_region
          %173 = dma.done [#allocation3], 512
        $region32: #{tpu_custom_call.1} parent=27 // pred_fallthru
          _
        %s174 = sand.u32 %s66, 1
        %s175 = scalar_lea.sflag [#allocation6], %s174
        %s176 = sand.u32 %s66, 1
        %s177 = smul.addr %s176, 80
        %s178 = scalar_lea.vmem [#allocation5], %s177
        // Predicated region
        $region33: #{tpu_custom_call.1} parent=27 // pred_check
          %p179 = pneg %p79
        $region34: #{tpu_custom_call.1} parent=27 // pred_check_branch
          %181 = sbr.rel (%p179) target = $region36
        $region35: #{tpu_custom_call.1} parent=27 // pred_region
          %182 = dma.done %s175, 1280
        $region36: #{tpu_custom_call.1} parent=27 // pred_fallthru
          _
        %p183 = pneg %p53
        %p184 = pneg %p50
        %s185 = sand.u32 %s66, 1
        %s186 = scalar_lea.sflag [#allocation6], %s185
        %s187 = sand.u32 %s66, 1
        %s188 = smul.addr %s187, 80
        %s189 = scalar_lea.vmem [#allocation5], %s188
        %p190 = pneg %p79
        %p191 = pneg %p76
        %p192 = pneg %p107
        %p193 = pneg %p104
        %s194 = sand.u32 %s94, 1
        %s195 = scalar_lea.sflag [#allocation4], %s194
        %s196 = sand.u32 %s94, 1
        %s197 = smul.addr %s196, 16
        %s198 = scalar_lea.vmem [#allocation7], %s197
        %s199 = smul.u32 2, %s24
        %s200 = smul.u32 2, %s24
        %v202 = vld [vmem:[#allocation2] sm:$0xff]
        %v203 = vld [vmem:[#allocation2 + $0x8] sm:$0xff]
        %v204 = vld [vmem:[#allocation2 + $0x10] sm:$0xff]
        %v205 = vld [vmem:[#allocation2 + $0x18] sm:$0xff]
        %v206 = vpack.c.bf16 %v204, %v202
        %v207 = vpack.c.bf16 %v205, %v203
        %v208 = vld [vmem:[%s178] sm:$0xf]
        %v209 = vld [vmem:[%s178 + $0x4] sm:$0xf]
        %v210 = vld [vmem:[%s178 + $0x8] sm:$0xf]
        %v211 = vld [vmem:[%s178 + $0xc] sm:$0xf]
        %v212 = vld [vmem:[%s178 + $0x10] sm:$0xf]
        %v213 = vld [vmem:[%s178 + $0x14] sm:$0xf]
        %v214 = vld [vmem:[%s178 + $0x18] sm:$0xf]
        %v215 = vld [vmem:[%s178 + $0x1c] sm:$0xf]
        %v216 = vld [vmem:[%s178 + $0x20] sm:$0xf]
        %v217 = vld [vmem:[%s178 + $0x24] sm:$0xf]
        %v218 = vld [vmem:[%s178 + $0x28] sm:$0xf]
        %v219 = vld [vmem:[%s178 + $0x2c] sm:$0xf]
        %v220 = vld [vmem:[%s178 + $0x30] sm:$0xf]
        %v221 = vld [vmem:[%s178 + $0x34] sm:$0xf]
        %v222 = vld [vmem:[%s178 + $0x38] sm:$0xf]
        %v223 = vld [vmem:[%s178 + $0x3c] sm:$0xf]
        %v224 = vld [vmem:[%s178 + $0x40] sm:$0xf]
        %v225 = vld [vmem:[%s178 + $0x44] sm:$0xf]
        %v226 = vld [vmem:[%s178 + $0x48] sm:$0xf]
        %v227 = vld [vmem:[%s178 + $0x4c] sm:$0xf]
        %v248 = vunpack.c.l.b16 %v208
        %v249 = vunpack.c.l.b16 %v209
        %v250 = vunpack.c.l.b16 %v210
        %v251 = vunpack.c.l.b16 %v211
        %v252 = vunpack.c.l.b16 %v212
        %v253 = vunpack.c.l.b16 %v213
        %v254 = vunpack.c.l.b16 %v214
        %v255 = vunpack.c.l.b16 %v215
        %v256 = vunpack.c.l.b16 %v216
        %v257 = vunpack.c.l.b16 %v217
        %v258 = vunpack.c.l.b16 %v218
        %v259 = vunpack.c.l.b16 %v219
        %v260 = vunpack.c.l.b16 %v220
        %v261 = vunpack.c.l.b16 %v221
        %v262 = vunpack.c.l.b16 %v222
        %v263 = vunpack.c.l.b16 %v223
        %v264 = vunpack.c.l.b16 %v224
        %v265 = vunpack.c.l.b16 %v225
        %v266 = vunpack.c.l.b16 %v226
        %v267 = vunpack.c.l.b16 %v227
        %v268 = vpack.c.b16 %v249, %v248
        %v269 = vpack.c.b16 %v251, %v250
        %v270 = vpack.c.b16 %v253, %v252
        %v271 = vpack.c.b16 %v255, %v254
        %v272 = vpack.c.b16 %v257, %v256
        %v273 = vpack.c.b16 %v259, %v258
        %v274 = vpack.c.b16 %v261, %v260
        %v275 = vpack.c.b16 %v263, %v262
        %v276 = vpack.c.b16 %v265, %v264
        %v277 = vpack.c.b16 %v267, %v266
        %vm288 = vcmask 261120
        %v290 = vsel %vm288, %v207, 0
        %292 = vmatprep.subr.bf16.mxu0 0
        %293 = vmatpush1.bf16.msra.mxu0 %v268
        %294 = vmatprep.subr.bf16.mxu0 0
        %295 = vmatpush1.bf16.msra.mxu0 %v269
        %296 = vmatprep.subr.bf16.mxu0 0
        %297 = vmatpush1.bf16.msra.mxu0 %v270
        %298 = vmatprep.subr.bf16.mxu0 0
        %299 = vmatpush1.bf16.msra.mxu0 %v271
        %300 = vmatprep.subr.bf16.mxu0 0
        %301 = vmatpush1.bf16.msra.mxu0 %v272
        %302 = vmatprep.subr.bf16.mxu0 0
        %303 = vmatpush1.bf16.msra.mxu0 %v273
        %304 = vmatprep.subr.bf16.mxu0 0
        %305 = vmatpush1.bf16.msra.mxu0 %v274
        %306 = vmatprep.subr.bf16.mxu0 0
        %307 = vmatpush1.bf16.msra.mxu0 %v275
        %308 = vmatprep.subr.bf16.mxu0 0
        %309 = vmatpush1.bf16.msra.mxu0 %v276
        %310 = vmatprep.subr.bf16.mxu0 0
        %311 = vmatpush1.bf16.msra.mxu0 %v277
        %312 = vmatprep.subr.bf16.mxu0 0
        %313 = vmatpush1.bf16.msra.mxu0 0
        %314 = vmatprep.subr.bf16.mxu0 0
        %315 = vmatpush1.bf16.msra.mxu0 0
        %316 = vmatprep.subr.bf16.mxu0 0
        %317 = vmatpush1.bf16.msra.mxu0 0
        %318 = vmatprep.subr.bf16.mxu0 0
        %319 = vmatpush1.bf16.msra.mxu0 0
        %320 = vmatprep.subr.bf16.mxu0 0
        %321 = vmatpush1.bf16.msra.mxu0 0
        %322 = vmatprep.subr.bf16.mxu0 0
        %323 = vmatpush1.bf16.msra.mxu0 0
        %324 = vmatprep.mubr.bf16.mxu0 %v290
        %325 = vmatmul.mubr.bf16.gmra.mrb[0].mxu0 %v206
        %v326 = vpop.f32.mrb[0].mxu0
        %v327 = vadd.f32 0.0, %v326
        %v328 = vpop.f32.mrb[0].mxu0
        %v329 = vpop.f32.mrb[0].mxu0
        %v330 = vadd.f32 0.0, %v329
        %v331 = vpop.f32.mrb[0].mxu0
        %332 = vdwg.mxu0
        %333 = vst [vmem:[%s198] sm:$0xff] %v327
        %334 = vst [vmem:[%s198 + $0x8] sm:$0xff] %v330
        %s335 = sand.u32 %s94, 1
        %s336 = scalar_lea.sflag [#allocation4], %s335
        %s337 = sand.u32 %s94, 1
        %s338 = smul.addr %s337, 16
        %s339 = scalar_lea.vmem [#allocation7], %s338
        // Predicated region
        $region37: #{tpu_custom_call.1} parent=27 // pred_check
          %p340 = pneg %p104
        $region38: #{tpu_custom_call.1} parent=27 // pred_check_branch
          %342 = sbr.rel (%p340) target = $region40
        $region39: #{tpu_custom_call.1} parent=27 // pred_region
          %s343 = smul.u32 2, %s24
          %s345 = ssub.s32 256, 256
          %346 = vsyncadd %s336, %s345
          %s347 = smul.addr %s343, 2
          %s348 = sadd.s32 %s25, %s347
          %s349 = smul.addr %s348, 128
          %s350 = scalar_lea.hbm %s2, %s349
          %s351 = sshll.u32 %s339, 4
          %s352 = int_to_ptr.vmem [resolvable:$true] %s351
          %357 = dma.vmem_to_hbm [thread:$0]  %s352, 256, %s350, %s336, 128, 256, 8
        $region40: #{tpu_custom_call.1} parent=27 // pred_fallthru
          _
      $region28: #{tpu_custom_call.1} parent=5 // pred_fallthru
        _
      %p358 = scmp.le.s32.totalorder 2, %s15
      // Predicated region
      $region41: #{tpu_custom_call.1} parent=5 // pred_check
        %p359 = pneg %p358
      $region42: #{tpu_custom_call.1} parent=5 // pred_check_branch
        %361 = sbr.rel (%p359) target = $region44
      $region43: #{tpu_custom_call.1} parent=5 // pred_region
        %s362 = ssub.s32 %s15, 2
        // Predicated region
        $region45: #{tpu_custom_call.1} parent=43 // pred_check
          %p363 = pneg %p110
        $region46: #{tpu_custom_call.1} parent=43 // pred_check_branch
          %365 = sbr.rel (%p363) target = $region48
        $region47: #{tpu_custom_call.1} parent=43 // pred_region
          %s366 = sand.u32 %s95, 1
          %s367 = scalar_lea.sflag [#allocation4], %s366
          %s368 = sand.u32 %s95, 1
          %s369 = smul.addr %s368, 16
          %s370 = scalar_lea.vmem [#allocation7], %s369
          %371 = dma.done %s367, 256
        $region48: #{tpu_custom_call.1} parent=43 // pred_fallthru
          _
      $region44: #{tpu_custom_call.1} parent=5 // pred_fallthru
        _
    $region6: #{tpu_custom_call.1} parent=1 // loop_footer
      %s19 = sadd.s32 1, %s15
    $region7: #{tpu_custom_call.1} parent=1 // loop_footer_branch
      %14 = sbr.rel target = $region3
    $region8: #{tpu_custom_call.1} parent=1 // loop_exit
      _
    %372 = vsyncpa [#allocation3], 1
    %s373 = scalar_lea.sflag [#allocation3], 1
    %374 = vsyncpa %s373, 1
    %375 = vsyncpa [#allocation6], 1
    %s376 = scalar_lea.sflag [#allocation6], 1
    %377 = vsyncpa %s376, 1
    %378 = vsyncpa [#allocation4], 1
    %s379 = scalar_lea.sflag [#allocation4], 1
    %380 = vsyncpa %s379, 1

</llo_original>
